<compile_context>
chip_gen: v5e
topology: v5e:2x2
jax: 0.10.0
libtpu: 0.0.40
codegen_flags: <defaults>
</compile_context>

<pallas_src>
import jax
import jax.numpy as jnp
from jax.experimental import pallas as pl
from jax.experimental.pallas import tpu as pltpu


def _round_up(x, m):
    return ((x + m - 1) // m) * m


# ----------------------------------------------------------------------------
# Kernel: feature-major, one packed slab input.
#   Slab rows: [0 : Dg]                gmf_user (pre-scaled by fc gmf column)
#              [Dg : Dg+2*Dm]          [mlp_user ; mlp_item]  (fc1 concat order)
#              [Dg+2*Dm : 2*(Dg+Dm)]   gmf_item
# ----------------------------------------------------------------------------
def make_neumf_kernel(dg, dm):
    d_mlp_lo = dg
    d_mlp_hi = dg + 2 * dm
    d_total = 2 * (dg + dm)

    def kernel(acts_ref, w1_ref, w2_ref, wfc_m_ref, o_ref):
        # GMF branch (VPU mul + XLU sublane reduce).  The fc weight column for
        # the gmf features is already folded into the user rows, so this sum
        # IS the gmf contribution to the logit.
        gmf_u = acts_ref[0:d_mlp_lo, :].astype(jnp.float32)          # (Dg, TB)
        gmf_i = acts_ref[d_mlp_hi:d_total, :].astype(jnp.float32)    # (Dg, TB)
        gmf_logit = jnp.sum(gmf_u * gmf_i, axis=0, keepdims=True)    # (1, TB)

        # MLP branch: the concat is just the middle rows of the slab -> one
        # unsplit (32, 2*Dm) MXU dot, then the small (16, 32) dot.
        mlp = acts_ref[d_mlp_lo:d_mlp_hi, :].astype(jnp.float32)     # (2Dm, TB)
        h1 = jnp.dot(w1_ref[...], mlp, preferred_element_type=jnp.float32)
        h1 = jnp.maximum(h1, 0.0)                                    # (32, TB)
        h2 = jnp.dot(w2_ref[...], h1, preferred_element_type=jnp.float32)
        h2 = jnp.maximum(h2, 0.0)                                    # (16, TB)

        # Final fc on the mlp half: VPU multiply + sublane reduction (no
        # 1-wide MXU matmul).
        mlp_logit = jnp.sum(h2 * wfc_m_ref[...], axis=0, keepdims=True)

        o_ref[...] = jax.nn.sigmoid(gmf_logit + mlp_logit)           # lane-dense

    return kernel


# ----------------------------------------------------------------------------
# One-time parameter preparation (hoisted packing / folding / casts).
# ----------------------------------------------------------------------------
def prepare_params(params, dtype=jnp.float32):
    dg = params["gmf_user_emb"].shape[1]
    dm = params["mlp_user_emb"].shape[1]
    w1 = params["w1"]            # (32, 2*Dm)  PyTorch (out, in) layout
    w2 = params["w2"]            # (16, 32)
    wfc = params["wfc"]          # (1, 32)
    assert wfc.shape[1] == dg + w2.shape[0], (
        "fc expects gmf_dim + 16 == 32 (gmf_dim must be 16)")

    wfc_g = wfc[0, :dg]          # fc column acting on the gmf features
    wfc_m = wfc[0, dg:]          # fc column acting on the mlp features

    # Fold wfc_g into the GMF user table: sum(wfc_g*gu*gi) == sum((gu*wfc_g)*gi).
    gmf_user_scaled = params["gmf_user_emb"] * wfc_g[None, :]

    # Packed per-id tables -> one contiguous row per lookup (cheap row gather).
    user_tbl = jnp.concatenate(
        [gmf_user_scaled, params["mlp_user_emb"]], axis=1).astype(dtype)
    item_tbl = jnp.concatenate(
        [params["mlp_item_emb"], params["gmf_item_emb"]], axis=1).astype(dtype)

    return dict(
        user_tbl=user_tbl,                                   # (n_users, Dg+Dm)
        item_tbl=item_tbl,                                   # (n_items, Dm+Dg)
        w1=w1.astype(jnp.float32),                           # (32, 2*Dm)
        w2=w2.astype(jnp.float32),                           # (16, 32)
        wfc_m=wfc_m.reshape(-1, 1).astype(jnp.float32),      # (16, 1)
        dg=dg, dm=dm)


# ----------------------------------------------------------------------------
# Forward wrapper.
# ----------------------------------------------------------------------------
def neumf_forward(x, prep, block_b=8192):
    """x: (B, 2) int32 [user, item] indices. Returns (B, 1) float32.

    block_b: batch (lane) tile.  Sweep 8192..32768; keep the double-buffered
    slab 2 * 2*(Dg+Dm) * block_b * itemsize well under 32 MiB on v7x.
    """
    user, item = x[:, 0], x[:, 1]
    B = x.shape[0]
    dg, dm = prep["dg"], prep["dm"]
    d_total = 2 * (dg + dm)
    dtype = prep["user_tbl"].dtype
    itemsize = jnp.dtype(dtype).itemsize

    # Effective batch tile: big for throughput, but don't pad a tiny batch up
    # to a huge tile.  Always a multiple of 512 (lane-friendly).
    block_b = _round_up(max(block_b, 512), 512)
    block_b_eff = min(block_b, _round_up(B, 512))
    nb = pl.cdiv(B, block_b_eff)
    bp = nb * block_b_eff

    if bp != B:
        pad = jnp.zeros((bp - B,), user.dtype)   # pads gather row 0; sliced off
        user = jnp.concatenate([user, pad])
        item = jnp.concatenate([item, pad])

    # Glue: contiguous row gathers from the packed tables + ONE transpose to
    # feature-major (much friendlier HBM pattern than minor-axis gathers of
    # transposed tables).
    # TODO(synk): fuse the gather into the kernel (scalar-prefetch indices +
    # VMEM-resident tables / manual DMA row gather) to remove this extra HBM
    # pass over the activations entirely.
    u_rows = jnp.take(prep["user_tbl"], user, axis=0)        # (bp, Dg+Dm)
    i_rows = jnp.take(prep["item_tbl"], item, axis=0)        # (bp, Dm+Dg)
    acts = jnp.concatenate([u_rows, i_rows], axis=1).T       # (d_total, bp)

    kernel = make_neumf_kernel(dg, dm)

    act_spec = pl.BlockSpec((d_total, block_b_eff), lambda i: (0, i))

    def w_spec(shape):
        return pl.BlockSpec(shape, lambda i: (0, 0))         # VMEM-resident

    # Explicit scoped-VMEM budget: double-buffered slab + output + weights +
    # headroom for Mosaic temporaries (h1/h2 at large block_b spill to VMEM).
    w_bytes = (prep["w1"].size + prep["w2"].size + prep["wfc_m"].size) * 4
    vmem_bytes = (2 * d_total * block_b_eff * itemsize       # slab, 2 buffers
                  + 2 * block_b_eff * 4                      # output, 2 buffers
                  + 2 * w_bytes                              # weights
                  + 8 * (1 << 20))                           # temp headroom
    vmem_limit = int(min(max(vmem_bytes, 32 * (1 << 20)), 112 * (1 << 20)))

    cost = pl.CostEstimate(
        flops=int(bp * (2 * 32 * 2 * dm + 2 * 16 * 32 + 3 * dg + 2 * 16 + 8)),
        transcendentals=int(bp),                              # sigmoid
        bytes_accessed=int(d_total * bp * itemsize + bp * 4 + w_bytes),
    )

    out = pl.pallas_call(
        kernel,
        out_shape=jax.ShapeDtypeStruct((1, bp), jnp.float32),
        grid=(nb,),
        in_specs=[act_spec,
                  w_spec(prep["w1"].shape),
                  w_spec(prep["w2"].shape),
                  w_spec(prep["wfc_m"].shape)],
        out_specs=pl.BlockSpec((1, block_b_eff), lambda i: (0, i)),
        compiler_params=pltpu.CompilerParams(
            dimension_semantics=("parallel",),
            vmem_limit_bytes=vmem_limit),
        cost_estimate=cost,
    )(acts, prep["w1"], prep["w2"], prep["wfc_m"])

    return out[0, :B].reshape(B, 1)


# ----------------------------------------------------------------------------
# Parameter init (matches PyTorch defaults: N(0,1) embeddings, bias-free
# Linears with U(-1/sqrt(in), 1/sqrt(in)) weights).
# ----------------------------------------------------------------------------
def init_params(key, n_users, n_items, gmf_dim, mlp_dim):
    ks = jax.random.split(key, 7)
    gmf_user_emb = jax.random.normal(ks[0], (n_users, gmf_dim), jnp.float32)
    gmf_item_emb = jax.random.normal(ks[1], (n_items, gmf_dim), jnp.float32)
    mlp_user_emb = jax.random.normal(ks[2], (n_users, mlp_dim), jnp.float32)
    mlp_item_emb = jax.random.normal(ks[3], (n_items, mlp_dim), jnp.float32)

    def linear_w(k, out_f, in_f):
        bound = 1.0 / jnp.sqrt(in_f)
        return jax.random.uniform(k, (out_f, in_f), jnp.float32, -bound, bound)

    w1 = linear_w(ks[4], 32, 2 * mlp_dim)
    w2 = linear_w(ks[5], 16, 32)
    wfc = linear_w(ks[6], 1, 32)
    return dict(gmf_user_emb=gmf_user_emb, gmf_item_emb=gmf_item_emb,
                mlp_user_emb=mlp_user_emb, mlp_item_emb=mlp_item_emb,
                w1=w1, w2=w2, wfc=wfc)


def reference_forward(x, params):
    user, item = x[:, 0], x[:, 1]
    gmf_x = params["gmf_user_emb"][user] * params["gmf_item_emb"][item]
    mlp_x = jnp.concatenate([params["mlp_user_emb"][user],
                             params["mlp_item_emb"][item]], axis=1)
    h1 = jax.nn.relu(mlp_x @ params["w1"].T)
    h2 = jax.nn.relu(h1 @ params["w2"].T)
    feat = jnp.concatenate([gmf_x, h2], axis=1)
    return jax.nn.sigmoid(feat @ params["wfc"].T)


if __name__ == "__main__":
    key = jax.random.PRNGKey(0)
    n_users, n_items = 10, 12
    gmf_dim, mlp_dim = 16, 16   # gmf_dim must be 16 so cat(gmf, h2) has width 32
    batch = 8

    pkey, ukey, ikey = jax.random.split(key, 3)
    params = init_params(pkey, n_users, n_items, gmf_dim, mlp_dim)

    users = jax.random.randint(ukey, (batch, 1), 0, n_users, jnp.int32)
    items = jax.random.randint(ikey, (batch, 1), 0, n_items, jnp.int32)
    x = jnp.concatenate([users, items], axis=1)                   # (B, 2)

    ref = reference_forward(x, params)

    # f32 tables: tight tolerance vs the f32 reference.
    prep_f32 = prepare_params(params, dtype=jnp.float32)
    out_f32 = jax.block_until_ready(neumf_forward(x, prep_f32))
    assert out_f32.shape == (batch, 1)
    assert jnp.allclose(out_f32, ref, atol=1e-5, rtol=1e-5)

    # bf16 tables: halves HBM traffic on the memory-bound activation path;
    # validated with a loosened tolerance (different numerics than f32).
    prep_bf16 = prepare_params(params, dtype=jnp.bfloat16)
    out_bf16 = jax.block_until_ready(neumf_forward(x, prep_bf16))
    assert out_bf16.shape == (batch, 1)
    assert jnp.allclose(out_bf16, ref, atol=3e-2, rtol=3e-2)

    print("KERNEL_OK")
</pallas_src>

<mosaic_0001>
module attributes {stable_mosaic.version = 11 : i64} {
  func.func @kernel(%arg0: i32, %arg1: memref<64x512xf32, #tpu.memory_space<vmem>>, %arg2: memref<32x32xf32, #tpu.memory_space<vmem>>, %arg3: memref<16x32xf32, #tpu.memory_space<vmem>>, %arg4: memref<16x1xf32, #tpu.memory_space<vmem>>, %arg5: memref<1x512xf32, #tpu.memory_space<vmem>>) attributes {dimension_semantics = [#tpu.dimension_semantics<parallel>], iteration_bounds = array<i64: 1>, scalar_prefetch = 0 : i64, scratch_operands = 0 : i64, tpu.core_type = #tpu.core_type<tc>, window_params = [{transform_indices = @transform_0, window_bounds = array<i64: 64, 512>}, {pipeline_mode = #tpu.pipeline_mode<synchronous>, transform_indices = @transform_1, window_bounds = array<i64: 32, 32>}, {pipeline_mode = #tpu.pipeline_mode<synchronous>, transform_indices = @transform_2, window_bounds = array<i64: 16, 32>}, {pipeline_mode = #tpu.pipeline_mode<synchronous>, transform_indices = @transform_3, window_bounds = array<i64: 16, 1>}, {transform_indices = @transform_4, window_bounds = array<i64: 1, 512>}]} {
    %c0 = arith.constant 0 : index
    %c0_0 = arith.constant 0 : index
    %0 = vector.load %arg1[%c0, %c0_0] : memref<64x512xf32, #tpu.memory_space<vmem>>, vector<16x512xf32>
    %c48 = arith.constant 48 : index
    %c0_1 = arith.constant 0 : index
    %1 = vector.load %arg1[%c48, %c0_1] : memref<64x512xf32, #tpu.memory_space<vmem>>, vector<16x512xf32>
    %2 = arith.mulf %0, %1 : vector<16x512xf32>
    %cst = arith.constant dense<0.000000e+00> : vector<512xf32>
    %3 = vector.multi_reduction <add>, %2, %cst [0] : vector<16x512xf32> to vector<512xf32>
    %4 = vector.shape_cast %3 : vector<512xf32> to vector<1x512xf32>
    %c16 = arith.constant 16 : index
    %c0_2 = arith.constant 0 : index
    %5 = vector.load %arg1[%c16, %c0_2] : memref<64x512xf32, #tpu.memory_space<vmem>>, vector<32x512xf32>
    %c0_3 = arith.constant 0 : index
    %c0_4 = arith.constant 0 : index
    %6 = vector.load %arg2[%c0_3, %c0_4] : memref<32x32xf32, #tpu.memory_space<vmem>>, vector<32x32xf32>
    %cst_5 = arith.constant dense<0.000000e+00> : vector<32x512xf32>
    %7 = tpu.matmul %6, %5, %cst_5 {dimension_numbers = #tpu.dot_dimension_numbers<[1], [0], [0], [1], [0, 0, 1, 1], [], []>} : vector<32x32xf32>, vector<32x512xf32>, vector<32x512xf32> -> vector<32x512xf32>
    %cst_6 = arith.constant 0.000000e+00 : f32
    %8 = vector.broadcast %cst_6 : f32 to vector<32x512xf32>
    %9 = arith.maximumf %7, %8 : vector<32x512xf32>
    %c0_7 = arith.constant 0 : index
    %c0_8 = arith.constant 0 : index
    %10 = vector.load %arg3[%c0_7, %c0_8] : memref<16x32xf32, #tpu.memory_space<vmem>>, vector<16x32xf32>
    %cst_9 = arith.constant dense<0.000000e+00> : vector<16x512xf32>
    %11 = tpu.matmul %10, %9, %cst_9 {dimension_numbers = #tpu.dot_dimension_numbers<[1], [0], [0], [1], [0, 0, 1, 1], [], []>} : vector<16x32xf32>, vector<32x512xf32>, vector<16x512xf32> -> vector<16x512xf32>
    %cst_10 = arith.constant 0.000000e+00 : f32
    %12 = vector.broadcast %cst_10 : f32 to vector<16x512xf32>
    %13 = arith.maximumf %11, %12 : vector<16x512xf32>
    %c0_11 = arith.constant 0 : index
    %c0_12 = arith.constant 0 : index
    %14 = vector.load %arg4[%c0_11, %c0_12] : memref<16x1xf32, #tpu.memory_space<vmem>>, vector<16x1xf32>
    %15 = vector.broadcast %14 : vector<16x1xf32> to vector<16x512xf32>
    %16 = arith.mulf %13, %15 : vector<16x512xf32>
    %cst_13 = arith.constant dense<0.000000e+00> : vector<512xf32>
    %17 = vector.multi_reduction <add>, %16, %cst_13 [0] : vector<16x512xf32> to vector<512xf32>
    %18 = vector.shape_cast %17 : vector<512xf32> to vector<1x512xf32>
    %19 = arith.addf %4, %18 : vector<1x512xf32>
    %20 = arith.negf %19 : vector<1x512xf32>
    %21 = math.exp %20 : vector<1x512xf32>
    %cst_14 = arith.constant 1.000000e+00 : f32
    %22 = vector.broadcast %cst_14 : f32 to vector<1x512xf32>
    %23 = arith.addf %22, %21 : vector<1x512xf32>
    %24 = arith.divf %22, %23 : vector<1x512xf32>
    %c0_15 = arith.constant 0 : index
    %c0_16 = arith.constant 0 : index
    %25 = vector.load %arg5[%c0_15, %c0_16] : memref<1x512xf32, #tpu.memory_space<vmem>>, vector<1x512xf32>
    tpu.vector_store %arg5[%c0_15, %c0_16], %24 {strides = array<i32>} : memref<1x512xf32, #tpu.memory_space<vmem>>, vector<1x512xf32>,
    return
  }
  func.func @transform_0(%arg0: i32) -> (i32, i32) {
    %c0_i32 = arith.constant 0 : i32
    %c0_i32_0 = arith.constant 0 : i32
    return %c0_i32, %arg0 : i32, i32
  }
  func.func @transform_1(%arg0: i32) -> (i32, i32) {
    %c0_i32 = arith.constant 0 : i32
    %c0_i32_0 = arith.constant 0 : i32
    %c0_i32_1 = arith.constant 0 : i32
    return %c0_i32, %c0_i32_0 : i32, i32
  }
  func.func @transform_2(%arg0: i32) -> (i32, i32) {
    %c0_i32 = arith.constant 0 : i32
    %c0_i32_0 = arith.constant 0 : i32
    %c0_i32_1 = arith.constant 0 : i32
    return %c0_i32, %c0_i32_0 : i32, i32
  }
  func.func @transform_3(%arg0: i32) -> (i32, i32) {
    %c0_i32 = arith.constant 0 : i32
    %c0_i32_0 = arith.constant 0 : i32
    %c0_i32_1 = arith.constant 0 : i32
    return %c0_i32, %c0_i32_0 : i32, i32
  }
  func.func @transform_4(%arg0: i32) -> (i32, i32) {
    %c0_i32 = arith.constant 0 : i32
    %c0_i32_0 = arith.constant 0 : i32
    return %c0_i32, %arg0 : i32, i32
  }
}

</mosaic_0001>

<llo_original>
// kernel: tpu_custom_call.1
$region0: #{tpu_custom_call.1}
  #allocation0 [shape = 'u32[]', space=smem, size = 0x4, offset = 0x4, fixed_abs, tag = 'smem constant byte address 0x4 - core index']
  #allocation1 [shape = 'u32[72,128]{1,0:T(1,128)}', space=vmem, size = 0x9000, scoped, tag = 'internal scratch']
  %s0 = inlined_call_operand.hbm [shape: f32[64,512], index: 0, kind: input, shape index: {}]
  %s1 = inlined_call_operand.hbm [shape: f32[32,32], index: 1, kind: input, shape index: {}]
  %s2 = inlined_call_operand.vmem [shape: f32[16,32], index: 2, kind: input, shape index: {}]
  %s3 = inlined_call_operand.vmem [shape: f32[16,1], index: 3, kind: input, shape index: {}]
  %s4 = inlined_call_operand.hbm [shape: f32[1,512], index: 4, kind: output, shape index: {}]
  %s5 = sld [smem:[#allocation0]]
  $region34: #{tpu_custom_call.1} parent=0
    _
  %s7 = ssub.s32 1, %s5
  %s8 = scalar_select 0, %s7, %s5
  $region1: #{tpu_custom_call.1} parent=0
    #allocation2 [shape = 'u8[131072]{0}', space=vmem, size = 0x20000, scoped, tag = 'input window, operand 0, single buffered']
    #allocation3 [shape = 's32[1]{0}', space=sflag, size = 0x4, scoped, tag = 'scoped memory for tpu_custom_call.1']
    #allocation4 [shape = 's32[1]{0}', space=sflag, size = 0x4, scoped, tag = 'scoped memory for tpu_custom_call.1']
    #allocation5 [shape = 'u8[16384]{0}', space=vmem, size = 0x4000, scoped, tag = 'input window, operand 1, single buffered']
    #allocation6 [shape = 's32[1]{0}', space=sflag, size = 0x4, scoped, tag = 'scoped memory for tpu_custom_call.1']
    #allocation7 [shape = 'u8[2048]{0}', space=vmem, size = 0x800, scoped, tag = 'output window, operand 0, single buffered']
    %9 = vsyncpa [#allocation3], 0
    %10 = vsyncpa [#allocation6], 0
    %11 = vsyncpa [#allocation4], 0
    // Predicated region
    $region2: #{tpu_custom_call.1} parent=1 // pred_check
      _
    $region3: #{tpu_custom_call.1} parent=1 // pred_check_branch
      %13 = sbr.rel (0) target = $region5
    $region4: #{tpu_custom_call.1} parent=1 // pred_region
      %15 = vsyncadd [#allocation3], 0
      %s16 = sshll.u32 %s0, 4
      %s17 = int_to_ptr.hbm [resolvable:$true] %s16
      %s18 = sshll.u32 [#allocation2], 4
      %s19 = int_to_ptr.vmem [resolvable:$true] %s18
      %24 = dma.hbm_to_vmem [thread:$0]  %s17, 4096, %s19, [#allocation3], 512, 512, 32
    $region5: #{tpu_custom_call.1} parent=1 // pred_fallthru
      _
    // Predicated region
    $region6: #{tpu_custom_call.1} parent=1 // pred_check
      _
    $region7: #{tpu_custom_call.1} parent=1 // pred_check_branch
      %26 = sbr.rel (0) target = $region9
    $region8: #{tpu_custom_call.1} parent=1 // pred_region
      %28 = vsyncadd [#allocation6], 0
      %s29 = sshll.u32 %s1, 4
      %s30 = int_to_ptr.hbm [resolvable:$true] %s29
      %s31 = sshll.u32 [#allocation5], 4
      %s32 = int_to_ptr.vmem [resolvable:$true] %s31
      %37 = dma.hbm_to_vmem [thread:$0]  %s30, 512, %s32, [#allocation6], 128, 128, 8
    $region9: #{tpu_custom_call.1} parent=1 // pred_fallthru
      _
    // Predicated region
    $region10: #{tpu_custom_call.1} parent=1 // pred_check
      _
    $region11: #{tpu_custom_call.1} parent=1 // pred_check_branch
      %39 = sbr.rel (0) target = $region13
    $region12: #{tpu_custom_call.1} parent=1 // pred_region
      _
    $region13: #{tpu_custom_call.1} parent=1 // pred_fallthru
      _
    // Predicated region
    $region14: #{tpu_custom_call.1} parent=1 // pred_check
      _
    $region15: #{tpu_custom_call.1} parent=1 // pred_check_branch
      %41 = sbr.rel (0) target = $region17
    $region16: #{tpu_custom_call.1} parent=1 // pred_region
      _
    $region17: #{tpu_custom_call.1} parent=1 // pred_fallthru
      _
    // Predicated region
    $region18: #{tpu_custom_call.1} parent=1 // pred_check
      _
    $region19: #{tpu_custom_call.1} parent=1 // pred_check_branch
      %43 = sbr.rel (0) target = $region21
    $region20: #{tpu_custom_call.1} parent=1 // pred_region
      %45 = dma.done [#allocation3], 4096
    $region21: #{tpu_custom_call.1} parent=1 // pred_fallthru
      _
    // Predicated region
    $region22: #{tpu_custom_call.1} parent=1 // pred_check
      _
    $region23: #{tpu_custom_call.1} parent=1 // pred_check_branch
      %47 = sbr.rel (0) target = $region25
    $region24: #{tpu_custom_call.1} parent=1 // pred_region
      %49 = dma.done [#allocation6], 512
    $region25: #{tpu_custom_call.1} parent=1 // pred_fallthru
      _
    %v50 = vld [vmem:[#allocation2] sm:$0xff]
    %v51 = vld [vmem:[#allocation2 + $0x8] sm:$0xff]
    %v52 = vld [vmem:[#allocation2 + $0x10] sm:$0xff]
    %v53 = vld [vmem:[#allocation2 + $0x18] sm:$0xff]
    %v54 = vld [vmem:[#allocation2 + $0x20] sm:$0xff]
    %v55 = vld [vmem:[#allocation2 + $0x28] sm:$0xff]
    %v56 = vld [vmem:[#allocation2 + $0x30] sm:$0xff]
    %v57 = vld [vmem:[#allocation2 + $0x38] sm:$0xff]
    %v58 = vld [vmem:[#allocation2 + $0xc0] sm:$0xff]
    %v59 = vld [vmem:[#allocation2 + $0xc8] sm:$0xff]
    %v60 = vld [vmem:[#allocation2 + $0xd0] sm:$0xff]
    %v61 = vld [vmem:[#allocation2 + $0xd8] sm:$0xff]
    %v62 = vld [vmem:[#allocation2 + $0xe0] sm:$0xff]
    %v63 = vld [vmem:[#allocation2 + $0xe8] sm:$0xff]
    %v64 = vld [vmem:[#allocation2 + $0xf0] sm:$0xff]
    %v65 = vld [vmem:[#allocation2 + $0xf8] sm:$0xff]
    %v66 = vmul.f32 %v50, %v58
    %v67 = vmul.f32 %v51, %v59
    %v68 = vmul.f32 %v52, %v60
    %v69 = vmul.f32 %v53, %v61
    %v70 = vmul.f32 %v54, %v62
    %v71 = vmul.f32 %v55, %v63
    %v72 = vmul.f32 %v56, %v64
    %v73 = vmul.f32 %v57, %v65
    %v74 = vadd.f32 %v66, %v70
    %v75 = vrot.slane %v74, 4
    %v76 = vadd.f32 %v74, %v75
    %v77 = vrot.slane %v76, 2
    %v78 = vadd.f32 %v76, %v77
    %v79 = vrot.slane %v78, 1
    %v80 = vadd.f32 %v78, %v79
    %v81 = vadd.f32 %v67, %v71
    %v82 = vrot.slane %v81, 4
    %v83 = vadd.f32 %v81, %v82
    %v84 = vrot.slane %v83, 2
    %v85 = vadd.f32 %v83, %v84
    %v86 = vrot.slane %v85, 1
    %v87 = vadd.f32 %v85, %v86
    %v88 = vadd.f32 %v68, %v72
    %v89 = vrot.slane %v88, 4
    %v90 = vadd.f32 %v88, %v89
    %v91 = vrot.slane %v90, 2
    %v92 = vadd.f32 %v90, %v91
    %v93 = vrot.slane %v92, 1
    %v94 = vadd.f32 %v92, %v93
    %v95 = vadd.f32 %v69, %v73
    %v96 = vrot.slane %v95, 4
    %v97 = vadd.f32 %v95, %v96
    %v98 = vrot.slane %v97, 2
    %v99 = vadd.f32 %v97, %v98
    %v100 = vrot.slane %v99, 1
    %v101 = vadd.f32 %v99, %v100
    %v102 = vld [vmem:[#allocation2 + $0x40] sm:$0xff]
    %v103 = vld [vmem:[#allocation2 + $0x48] sm:$0xff]
    %v104 = vld [vmem:[#allocation2 + $0x50] sm:$0xff]
    %v105 = vld [vmem:[#allocation2 + $0x58] sm:$0xff]
    %v106 = vld [vmem:[#allocation2 + $0x60] sm:$0xff]
    %v107 = vld [vmem:[#allocation2 + $0x68] sm:$0xff]
    %v108 = vld [vmem:[#allocation2 + $0x70] sm:$0xff]
    %v109 = vld [vmem:[#allocation2 + $0x78] sm:$0xff]
    %v110 = vld [vmem:[#allocation2 + $0x80] sm:$0xff]
    %v111 = vld [vmem:[#allocation2 + $0x88] sm:$0xff]
    %v112 = vld [vmem:[#allocation2 + $0x90] sm:$0xff]
    %v113 = vld [vmem:[#allocation2 + $0x98] sm:$0xff]
    %v114 = vld [vmem:[#allocation2 + $0xa0] sm:$0xff]
    %v115 = vld [vmem:[#allocation2 + $0xa8] sm:$0xff]
    %v116 = vld [vmem:[#allocation2 + $0xb0] sm:$0xff]
    %v117 = vld [vmem:[#allocation2 + $0xb8] sm:$0xff]
    %v118 = vld [vmem:[#allocation5] sm:$0xff]
    %v119 = vld [vmem:[#allocation5 + $0x8] sm:$0xff]
    %v120 = vld [vmem:[#allocation5 + $0x10] sm:$0xff]
    %v121 = vld [vmem:[#allocation5 + $0x18] sm:$0xff]
    %vm122 = vcmask 261120
    %v124 = vsel %vm122, %v118, 0
    %v127 = vsel %vm122, %v119, 0
    %v130 = vsel %vm122, %v120, 0
    %v133 = vsel %vm122, %v121, 0
    %135 = vmatpush.msra.mxu0 0.0
    %136 = vmatpush.msra.mxu0 0.0
    %137 = vmatpush.msra.mxu0 0.0
    %138 = vmatpush.msra.mxu0 0.0
    %139 = vmatpush.msra.mxu0 0.0
    %140 = vmatpush.msra.mxu0 0.0
    %141 = vmatpush.msra.mxu0 0.0
    %142 = vmatpush.msra.mxu0 0.0
    %143 = vmatpush.msra.mxu0 0.0
    %144 = vmatpush.msra.mxu0 0.0
    %145 = vmatpush.msra.mxu0 0.0
    %146 = vmatpush.msra.mxu0 0.0
    %147 = vmatpush.msra.mxu0 %v114
    %148 = vmatpush.msra.mxu0 %v110
    %149 = vmatpush.msra.mxu0 %v106
    %150 = vmatpush.msra.mxu0 %v102
    %151 = vmatmul.f32.gmra.mxu0 %v124
    %v152 = vpop.f32.mrf.mxu0
    %v153 = vadd.f32 0.0, %v152
    %154 = vmatmul.f32.gmra.mxu0 %v127
    %v155 = vpop.f32.mrf.mxu0
    %v156 = vadd.f32 0.0, %v155
    %157 = vmatmul.f32.gmra.mxu0 %v130
    %v158 = vpop.f32.mrf.mxu0
    %v159 = vadd.f32 0.0, %v158
    %160 = vmatmul.f32.gmra.mxu0 %v133
    %v161 = vpop.f32.mrf.mxu0
    %v162 = vadd.f32 0.0, %v161
    %163 = vdwg.mxu0
    %164 = vmatpush.msra.mxu0 0.0
    %165 = vmatpush.msra.mxu0 0.0
    %166 = vmatpush.msra.mxu0 0.0
    %167 = vmatpush.msra.mxu0 0.0
    %168 = vmatpush.msra.mxu0 0.0
    %169 = vmatpush.msra.mxu0 0.0
    %170 = vmatpush.msra.mxu0 0.0
    %171 = vmatpush.msra.mxu0 0.0
    %172 = vmatpush.msra.mxu0 0.0
    %173 = vmatpush.msra.mxu0 0.0
    %174 = vmatpush.msra.mxu0 0.0
    %175 = vmatpush.msra.mxu0 0.0
    %176 = vmatpush.msra.mxu0 %v115
    %177 = vmatpush.msra.mxu0 %v111
    %178 = vmatpush.msra.mxu0 %v107
    %179 = vmatpush.msra.mxu0 %v103
    %180 = vmatmul.f32.gmra.mxu0 %v124
    %v181 = vpop.f32.mrf.mxu0
    %v182 = vadd.f32 0.0, %v181
    %183 = vmatmul.f32.gmra.mxu0 %v127
    %v184 = vpop.f32.mrf.mxu0
    %v185 = vadd.f32 0.0, %v184
    %186 = vmatmul.f32.gmra.mxu0 %v130
    %v187 = vpop.f32.mrf.mxu0
    %v188 = vadd.f32 0.0, %v187
    %189 = vmatmul.f32.gmra.mxu0 %v133
    %v190 = vpop.f32.mrf.mxu0
    %v191 = vadd.f32 0.0, %v190
    %192 = vdwg.mxu0
    %193 = vmatpush.msra.mxu0 0.0
    %194 = vmatpush.msra.mxu0 0.0
    %195 = vmatpush.msra.mxu0 0.0
    %196 = vmatpush.msra.mxu0 0.0
    %197 = vmatpush.msra.mxu0 0.0
    %198 = vmatpush.msra.mxu0 0.0
    %199 = vmatpush.msra.mxu0 0.0
    %200 = vmatpush.msra.mxu0 0.0
    %201 = vmatpush.msra.mxu0 0.0
    %202 = vmatpush.msra.mxu0 0.0
    %203 = vmatpush.msra.mxu0 0.0
    %204 = vmatpush.msra.mxu0 0.0
    %205 = vmatpush.msra.mxu0 %v116
    %206 = vmatpush.msra.mxu0 %v112
    %207 = vmatpush.msra.mxu0 %v108
    %208 = vmatpush.msra.mxu0 %v104
    %209 = vmatmul.f32.gmra.mxu0 %v124
    %v210 = vpop.f32.mrf.mxu0
    %v211 = vadd.f32 0.0, %v210
    %212 = vmatmul.f32.gmra.mxu0 %v127
    %v213 = vpop.f32.mrf.mxu0
    %v214 = vadd.f32 0.0, %v213
    %215 = vmatmul.f32.gmra.mxu0 %v130
    %v216 = vpop.f32.mrf.mxu0
    %v217 = vadd.f32 0.0, %v216
    %218 = vmatmul.f32.gmra.mxu0 %v133
    %v219 = vpop.f32.mrf.mxu0
    %v220 = vadd.f32 0.0, %v219
    %221 = vdwg.mxu0
    %222 = vmatpush.msra.mxu0 0.0
    %223 = vmatpush.msra.mxu0 0.0
    %224 = vmatpush.msra.mxu0 0.0
    %225 = vmatpush.msra.mxu0 0.0
    %226 = vmatpush.msra.mxu0 0.0
    %227 = vmatpush.msra.mxu0 0.0
    %228 = vmatpush.msra.mxu0 0.0
    %229 = vmatpush.msra.mxu0 0.0
    %230 = vmatpush.msra.mxu0 0.0
    %231 = vmatpush.msra.mxu0 0.0
    %232 = vmatpush.msra.mxu0 0.0
    %233 = vmatpush.msra.mxu0 0.0
    %234 = vmatpush.msra.mxu0 %v117
    %235 = vmatpush.msra.mxu0 %v113
    %236 = vmatpush.msra.mxu0 %v109
    %237 = vmatpush.msra.mxu0 %v105
    %238 = vmatmul.f32.gmra.mxu0 %v124
    %v239 = vpop.f32.mrf.mxu0
    %v240 = vadd.f32 0.0, %v239
    %241 = vmatmul.f32.gmra.mxu0 %v127
    %v242 = vpop.f32.mrf.mxu0
    %v243 = vadd.f32 0.0, %v242
    %244 = vmatmul.f32.gmra.mxu0 %v130
    %v245 = vpop.f32.mrf.mxu0
    %v246 = vadd.f32 0.0, %v245
    %247 = vmatmul.f32.gmra.mxu0 %v133
    %v248 = vpop.f32.mrf.mxu0
    %v249 = vadd.f32 0.0, %v248
    %250 = vdwg.mxu0
    %v251 = vmax.f32 %v153, 0.0
    %v252 = vmax.f32 %v182, 0.0
    %v253 = vmax.f32 %v211, 0.0
    %v254 = vmax.f32 %v240, 0.0
    %v255 = vmax.f32 %v156, 0.0
    %v256 = vmax.f32 %v185, 0.0
    %v257 = vmax.f32 %v214, 0.0
    %v258 = vmax.f32 %v243, 0.0
    %v259 = vmax.f32 %v159, 0.0
    %v260 = vmax.f32 %v188, 0.0
    %v261 = vmax.f32 %v217, 0.0
    %v262 = vmax.f32 %v246, 0.0
    %v263 = vmax.f32 %v162, 0.0
    %v264 = vmax.f32 %v191, 0.0
    %v265 = vmax.f32 %v220, 0.0
    %v266 = vmax.f32 %v249, 0.0
    %v267 = vld [vmem:[%s2] sm:$0xff]
    %v268 = vld [vmem:[%s2 + $0x8] sm:$0xff]
    %v270 = vsel %vm122, %v267, 0
    %v273 = vsel %vm122, %v268, 0
    %275 = vmatpush.msra.mxu0 0.0
    %276 = vmatpush.msra.mxu0 0.0
    %277 = vmatpush.msra.mxu0 0.0
    %278 = vmatpush.msra.mxu0 0.0
    %279 = vmatpush.msra.mxu0 0.0
    %280 = vmatpush.msra.mxu0 0.0
    %281 = vmatpush.msra.mxu0 0.0
    %282 = vmatpush.msra.mxu0 0.0
    %283 = vmatpush.msra.mxu0 0.0
    %284 = vmatpush.msra.mxu0 0.0
    %285 = vmatpush.msra.mxu0 0.0
    %286 = vmatpush.msra.mxu0 0.0
    %287 = vmatpush.msra.mxu0 %v263
    %288 = vmatpush.msra.mxu0 %v259
    %289 = vmatpush.msra.mxu0 %v255
    %290 = vmatpush.msra.mxu0 %v251
    %291 = vmatmul.f32.gmra.mxu0 %v270
    %v292 = vpop.f32.mrf.mxu0
    %v293 = vadd.f32 0.0, %v292
    %294 = vmatmul.f32.gmra.mxu0 %v273
    %v295 = vpop.f32.mrf.mxu0
    %v296 = vadd.f32 0.0, %v295
    %297 = vdwg.mxu0
    %298 = vmatpush.msra.mxu0 0.0
    %299 = vmatpush.msra.mxu0 0.0
    %300 = vmatpush.msra.mxu0 0.0
    %301 = vmatpush.msra.mxu0 0.0
    %302 = vmatpush.msra.mxu0 0.0
    %303 = vmatpush.msra.mxu0 0.0
    %304 = vmatpush.msra.mxu0 0.0
    %305 = vmatpush.msra.mxu0 0.0
    %306 = vmatpush.msra.mxu0 0.0
    %307 = vmatpush.msra.mxu0 0.0
    %308 = vmatpush.msra.mxu0 0.0
    %309 = vmatpush.msra.mxu0 0.0
    %310 = vmatpush.msra.mxu0 %v264
    %311 = vmatpush.msra.mxu0 %v260
    %312 = vmatpush.msra.mxu0 %v256
    %313 = vmatpush.msra.mxu0 %v252
    %314 = vmatmul.f32.gmra.mxu0 %v270
    %v315 = vpop.f32.mrf.mxu0
    %v316 = vadd.f32 0.0, %v315
    %317 = vmatmul.f32.gmra.mxu0 %v273
    %v318 = vpop.f32.mrf.mxu0
    %v319 = vadd.f32 0.0, %v318
    %320 = vdwg.mxu0
    %321 = vmatpush.msra.mxu0 0.0
    %322 = vmatpush.msra.mxu0 0.0
    %323 = vmatpush.msra.mxu0 0.0
    %324 = vmatpush.msra.mxu0 0.0
    %325 = vmatpush.msra.mxu0 0.0
    %326 = vmatpush.msra.mxu0 0.0
    %327 = vmatpush.msra.mxu0 0.0
    %328 = vmatpush.msra.mxu0 0.0
    %329 = vmatpush.msra.mxu0 0.0
    %330 = vmatpush.msra.mxu0 0.0
    %331 = vmatpush.msra.mxu0 0.0
    %332 = vmatpush.msra.mxu0 0.0
    %333 = vmatpush.msra.mxu0 %v265
    %334 = vmatpush.msra.mxu0 %v261
    %335 = vmatpush.msra.mxu0 %v257
    %336 = vmatpush.msra.mxu0 %v253
    %337 = vmatmul.f32.gmra.mxu0 %v270
    %v338 = vpop.f32.mrf.mxu0
    %v339 = vadd.f32 0.0, %v338
    %340 = vmatmul.f32.gmra.mxu0 %v273
    %v341 = vpop.f32.mrf.mxu0
    %v342 = vadd.f32 0.0, %v341
    %343 = vdwg.mxu0
    %344 = vmatpush.msra.mxu0 0.0
    %345 = vmatpush.msra.mxu0 0.0
    %346 = vmatpush.msra.mxu0 0.0
    %347 = vmatpush.msra.mxu0 0.0
    %348 = vmatpush.msra.mxu0 0.0
    %349 = vmatpush.msra.mxu0 0.0
    %350 = vmatpush.msra.mxu0 0.0
    %351 = vmatpush.msra.mxu0 0.0
    %352 = vmatpush.msra.mxu0 0.0
    %353 = vmatpush.msra.mxu0 0.0
    %354 = vmatpush.msra.mxu0 0.0
    %355 = vmatpush.msra.mxu0 0.0
    %356 = vmatpush.msra.mxu0 %v266
    %357 = vmatpush.msra.mxu0 %v262
    %358 = vmatpush.msra.mxu0 %v258
    %359 = vmatpush.msra.mxu0 %v254
    %360 = vmatmul.f32.gmra.mxu0 %v270
    %v361 = vpop.f32.mrf.mxu0
    %v362 = vadd.f32 0.0, %v361
    %363 = vmatmul.f32.gmra.mxu0 %v273
    %v364 = vpop.f32.mrf.mxu0
    %v365 = vadd.f32 0.0, %v364
    %366 = vdwg.mxu0
    %v367 = vmax.f32 %v293, 0.0
    %v368 = vmax.f32 %v316, 0.0
    %v369 = vmax.f32 %v339, 0.0
    %v370 = vmax.f32 %v362, 0.0
    %v371 = vmax.f32 %v296, 0.0
    %v372 = vmax.f32 %v319, 0.0
    %v373 = vmax.f32 %v342, 0.0
    %v374 = vmax.f32 %v365, 0.0
    %v375 = vld [vmem:[%s3] sm:$0xff]
    %v376 = vld [vmem:[%s3 + $0x8] sm:$0xff]
    %378 = vset.pattern.permute.xlu0 0
    %379 = vperm.xlu0 %378, %v375
    %v380 = vpop.permute.xlu0 %379
    %383 = vset.pattern.permute.xlu0 0
    %384 = vperm.xlu0 %383, %v376
    %v385 = vpop.permute.xlu0 %384
    %v387 = vmul.f32 %v367, %v380
    %v388 = vmul.f32 %v368, %v380
    %v389 = vmul.f32 %v369, %v380
    %v390 = vmul.f32 %v370, %v380
    %v391 = vmul.f32 %v371, %v385
    %v392 = vmul.f32 %v372, %v385
    %v393 = vmul.f32 %v373, %v385
    %v394 = vmul.f32 %v374, %v385
    %v395 = vadd.f32 %v387, %v391
    %v396 = vrot.slane %v395, 4
    %v397 = vadd.f32 %v395, %v396
    %v398 = vrot.slane %v397, 2
    %v399 = vadd.f32 %v397, %v398
    %v400 = vrot.slane %v399, 1
    %v401 = vadd.f32 %v399, %v400
    %v402 = vadd.f32 %v388, %v392
    %v403 = vrot.slane %v402, 4
    %v404 = vadd.f32 %v402, %v403
    %v405 = vrot.slane %v404, 2
    %v406 = vadd.f32 %v404, %v405
    %v407 = vrot.slane %v406, 1
    %v408 = vadd.f32 %v406, %v407
    %v409 = vadd.f32 %v389, %v393
    %v410 = vrot.slane %v409, 4
    %v411 = vadd.f32 %v409, %v410
    %v412 = vrot.slane %v411, 2
    %v413 = vadd.f32 %v411, %v412
    %v414 = vrot.slane %v413, 1
    %v415 = vadd.f32 %v413, %v414
    %v416 = vadd.f32 %v390, %v394
    %v417 = vrot.slane %v416, 4
    %v418 = vadd.f32 %v416, %v417
    %v419 = vrot.slane %v418, 2
    %v420 = vadd.f32 %v418, %v419
    %v421 = vrot.slane %v420, 1
    %v422 = vadd.f32 %v420, %v421
    %v423 = vadd.f32 %v80, %v401
    %v424 = vadd.f32 %v87, %v408
    %v425 = vadd.f32 %v94, %v415
    %v426 = vadd.f32 %v101, %v422
    %v427 = vxor.u32 %v423, 2147483648
    %v428 = vxor.u32 %v424, 2147483648
    %v429 = vxor.u32 %v425, 2147483648
    %v430 = vxor.u32 %v426, 2147483648
    %v431 = vmul.f32 %v427, 1.442695
    %v432 = vpow.pop %v431
    %v433 = vmul.f32 %v428, 1.442695
    %v434 = vpow.pop %v433
    %v435 = vmul.f32 %v429, 1.442695
    %v436 = vpow.pop %v435
    %v437 = vmul.f32 %v430, 1.442695
    %v438 = vpow.pop %v437
    %v439 = vadd.f32 %v432, 1.0
    %v440 = vadd.f32 %v434, 1.0
    %v441 = vadd.f32 %v436, 1.0
    %v442 = vadd.f32 %v438, 1.0
    %v443 = vrcp.pop %v439
    %v444 = vmul.f32 %v439, %v443
    %v445 = vsub.f32 1.0, %v444
    %v446 = vmul.f32 %v443, %v445
    %v447 = vadd.f32 %v443, %v446
    %vm448 = vweird.f32 %v439
    %vm449 = vweird.f32 %v443
    %vm450 = vmor %vm448, %vm449
    %v451 = vsel %vm450, %v443, %v447
    %v452 = vand.u32 2147483647, %v439
    %vm453 = vcmp.eq.f32.partialorder %v452, 8.507059e+37
    %v454 = vand.u32 %v439, 2147483648
    %v455 = vor.u32 1.1754944e-38, %v454
    %v456 = vsel %vm453, %v455, %v451
    %v457 = vmul.f32 1.0, %v456
    %v458 = vrcp.pop %v440
    %v459 = vmul.f32 %v440, %v458
    %v460 = vsub.f32 1.0, %v459
    %v461 = vmul.f32 %v458, %v460
    %v462 = vadd.f32 %v458, %v461
    %vm463 = vweird.f32 %v440
    %vm464 = vweird.f32 %v458
    %vm465 = vmor %vm463, %vm464
    %v466 = vsel %vm465, %v458, %v462
    %v467 = vand.u32 2147483647, %v440
    %vm468 = vcmp.eq.f32.partialorder %v467, 8.507059e+37
    %v469 = vand.u32 %v440, 2147483648
    %v470 = vor.u32 1.1754944e-38, %v469
    %v471 = vsel %vm468, %v470, %v466
    %v472 = vmul.f32 1.0, %v471
    %v473 = vrcp.pop %v441
    %v474 = vmul.f32 %v441, %v473
    %v475 = vsub.f32 1.0, %v474
    %v476 = vmul.f32 %v473, %v475
    %v477 = vadd.f32 %v473, %v476
    %vm478 = vweird.f32 %v441
    %vm479 = vweird.f32 %v473
    %vm480 = vmor %vm478, %vm479
    %v481 = vsel %vm480, %v473, %v477
    %v482 = vand.u32 2147483647, %v441
    %vm483 = vcmp.eq.f32.partialorder %v482, 8.507059e+37
    %v484 = vand.u32 %v441, 2147483648
    %v485 = vor.u32 1.1754944e-38, %v484
    %v486 = vsel %vm483, %v485, %v481
    %v487 = vmul.f32 1.0, %v486
    %v488 = vrcp.pop %v442
    %v489 = vmul.f32 %v442, %v488
    %v490 = vsub.f32 1.0, %v489
    %v491 = vmul.f32 %v488, %v490
    %v492 = vadd.f32 %v488, %v491
    %vm493 = vweird.f32 %v442
    %vm494 = vweird.f32 %v488
    %vm495 = vmor %vm493, %vm494
    %v496 = vsel %vm495, %v488, %v492
    %v497 = vand.u32 2147483647, %v442
    %vm498 = vcmp.eq.f32.partialorder %v497, 8.507059e+37
    %v499 = vand.u32 %v442, 2147483648
    %v500 = vor.u32 1.1754944e-38, %v499
    %v501 = vsel %vm498, %v500, %v496
    %v502 = vmul.f32 1.0, %v501
    %v507 = vrot.slane %v472, 7
    %v508 = vrot.slane %v487, 6
    %v509 = vrot.slane %v502, 5
    %vm510 = vcmask 1040384
    %v511 = vsel %vm510, %v457, %v507
    %vm512 = vcmask 1042434
    %v513 = vsel %vm512, %v508, %v509
    %vm514 = vcmask 1041408
    %v515 = vsel %vm514, %v511, %v513
    %v517 = vlaneseq
    %vm518 = vcmp.ge.s32.totalorder %v517, 0
    %vm519 = vcmp.lt.s32.totalorder %v517, 512
    %vm520 = vmand %vm518, %vm519
    %521 = vst.msk [vmem:[#allocation7] sm:$0xf] %vm520, %v515
    // Predicated region
    $region26: #{tpu_custom_call.1} parent=1 // pred_check
      _
    $region27: #{tpu_custom_call.1} parent=1 // pred_check_branch
      %523 = sbr.rel (0) target = $region29
    $region28: #{tpu_custom_call.1} parent=1 // pred_region
      %525 = vsyncadd [#allocation4], 0
      %s527 = sshll.u32 [#allocation7], 4
      %s528 = int_to_ptr.vmem [resolvable:$true] %s527
      %s529 = sshll.u32 %s4, 4
      %s530 = int_to_ptr.hbm [resolvable:$true] %s529
      %532 = dma.vmem_to_hbm [thread:$0]  %s528, 64, %s530, [#allocation4]
    $region29: #{tpu_custom_call.1} parent=1 // pred_fallthru
      _
    // Predicated region
    $region30: #{tpu_custom_call.1} parent=1 // pred_check
      _
    $region31: #{tpu_custom_call.1} parent=1 // pred_check_branch
      %534 = sbr.rel (0) target = $region33
    $region32: #{tpu_custom_call.1} parent=1 // pred_region
      %536 = dma.done [#allocation4], 64
    $region33: #{tpu_custom_call.1} parent=1 // pred_fallthru
      _
    %537 = vsyncpa [#allocation3], 1
    %538 = vsyncpa [#allocation6], 1
    %539 = vsyncpa [#allocation4], 1

</llo_original>
